<compile_context>
chip_gen: v5e
topology: v5e:2x2
jax: 0.10.0
libtpu: 0.0.40
codegen_flags: <defaults>
</compile_context>

<pallas_src>
import functools

import jax
import jax.numpy as jnp
from jax.experimental import pallas as pl
from jax.experimental.pallas import tpu as pltpu


def _bf16_eltwise_supported():
    """bf16 VPU/EUP (tanh) path exists on v6e/v7x; v5e and earlier lack it."""
    try:
        kind = jax.devices()[0].device_kind.lower()
    except Exception:
        return False
    return ("v6" in kind) or ("v7" in kind) or ("tpu7" in kind)


_BF16_ELTWISE_OK = _bf16_eltwise_supported()


def _round_up(x, m):
    return ((x + m - 1) // m) * m


def _head_kernel(x_ref, wd_ref, bd_ref, wo_ref, bo_ref, out_ref, *, bf16_eltwise):
    # x_ref:  (TB, H) f32 (CLS rows)     wd_ref: (H, H)  bf16
    # bd_ref: (1, H)  f32                wo_ref: (H, Lp) bf16 (zero-padded)
    # bo_ref: (1, Lp) f32 (zero-padded)  out_ref:(TB, Lp) f32
    # TODO(synk): training-mode dropout (PRNG mask) intentionally omitted;
    # eval-mode dropout is the identity.
    x = x_ref[...].astype(wd_ref.dtype)          # bf16 cast hides under the MXU
    # dense: bf16 MXU matmul, f32 accumulation.
    h = jnp.dot(x, wd_ref[...], preferred_element_type=jnp.float32)
    h = h + bd_ref[...]
    if bf16_eltwise:
        # v6e/v7x: bf16 EUP tanh; result already in MXU input dtype.
        h = jnp.tanh(h.astype(wo_ref.dtype))
    else:
        # v5e (no bf16 VPU/EUP): tanh in f32, then cast for the MXU.
        h = jnp.tanh(h).astype(wo_ref.dtype)
    # out_proj: bf16 MXU matmul on a lane-dense (padded) label dim.
    o = jnp.dot(h, wo_ref[...], preferred_element_type=jnp.float32)
    out_ref[...] = (o + bo_ref[...]).astype(out_ref.dtype)


def prepare_roberta_head_params(w_dense, b_dense, w_out, b_out,
                                compute_dtype=jnp.bfloat16):
    """One-time (model-load) prep: transpose weights to x @ W layout, cast MXU
    operands to bf16, and zero-pad the label dim to a multiple of 128 so the
    kernel's output tile is lane-dense. Do NOT call this per forward pass."""
    w_dense = jnp.asarray(w_dense, jnp.float32)
    w_out = jnp.asarray(w_out, jnp.float32)
    H = w_dense.shape[1]
    L = w_out.shape[0]
    Lp = _round_up(L, 128)
    wo_t = w_out.T.astype(compute_dtype)                               # (H, L)
    wo_t = jnp.pad(wo_t, ((0, 0), (0, Lp - L)))                        # (H, Lp)
    bo = jnp.pad(jnp.asarray(b_out, jnp.float32), (0, Lp - L))
    return {
        "wd_t": w_dense.T.astype(compute_dtype),                       # (H, H)
        "bd": jnp.asarray(b_dense, jnp.float32).reshape(1, H),         # (1, H)
        "wo_t": wo_t,                                                  # (H, Lp)
        "bo": bo.reshape(1, Lp),                                       # (1, Lp)
    }


@functools.partial(jax.jit, static_argnames=("num_labels", "batch_tile"))
def roberta_classification_head(features, params, *, num_labels, batch_tile=512):
    """features: [B, S, H]; params from prepare_roberta_head_params.
    Returns [B, num_labels] float32 logits."""
    B, S, H = features.shape
    Lp = params["wo_t"].shape[1]

    if H % 128 == 0:
        # Free row-major reshape; the kernel's activation block reads columns
        # 0:H of each row, i.e. exactly features[:, 0, :]. No extra XLA op, no
        # doubled activation HBM traffic.
        x_in = features.reshape(B, S * H)
    else:
        # TODO(synk): lane-unaligned hidden size -> fall back to a wrapper-side
        # CLS slice (BlockSpec last dim must be 128-aligned or full-extent).
        x_in = features[:, 0, :]

    # Batch tile: >=2 grid programs when B allows it so the "parallel" axis can
    # be sharded across both v7x TensorCores, and sublane-aligned (multiple of
    # 8) whenever a partial tile exists.
    tb = min(batch_tile, B)
    if B >= 16:
        half = _round_up(-(-B // 2), 8)
        tb = min(tb, half)
    if tb < B:
        tb = _round_up(tb, 8)
    grid = (pl.cdiv(B, tb),)

    kernel = functools.partial(_head_kernel, bf16_eltwise=_BF16_ELTWISE_OK)

    wbytes = params["wd_t"].dtype.itemsize
    cost = pl.CostEstimate(
        flops=2 * B * H * (H + Lp),
        transcendentals=B * H,
        bytes_accessed=(B * H * x_in.dtype.itemsize            # CLS activations
                        + (H * H + H * Lp) * wbytes            # weights
                        + (H + Lp) * 4                         # biases
                        + B * Lp * 4),                         # output
    )

    out = pl.pallas_call(
        kernel,
        out_shape=jax.ShapeDtypeStruct((B, Lp), jnp.float32),
        grid_spec=pltpu.PrefetchScalarGridSpec(
            num_scalar_prefetch=0,
            grid=grid,
            in_specs=[
                # Activations: CLS rows, tiled over batch (double-buffered).
                pl.BlockSpec((tb, H), lambda i: (i, 0)),
                # Weights / biases: constant index_map -> loaded once, resident.
                pl.BlockSpec((H, H), lambda i: (0, 0)),
                pl.BlockSpec((1, H), lambda i: (0, 0)),
                pl.BlockSpec((H, Lp), lambda i: (0, 0)),
                pl.BlockSpec((1, Lp), lambda i: (0, 0)),
            ],
            out_specs=pl.BlockSpec((tb, Lp), lambda i: (i, 0)),
        ),
        compiler_params=pltpu.CompilerParams(
            dimension_semantics=("parallel",),
            vmem_limit_bytes=32 * 1024 * 1024,
        ),
        cost_estimate=cost,
    )(x_in, params["wd_t"], params["bd"], params["wo_t"], params["bo"])

    return out[:, :num_labels]


if __name__ == "__main__":
    # Small shapes consistent with the module: batch=2, seq=8, hidden=128
    # (lane-aligned so the folded CLS-slice path is exercised), labels=4.
    B, S, H, L = 2, 8, 128, 4

    key = jax.random.PRNGKey(0)
    k_feat, k_wd, k_bd, k_wo, k_bo = jax.random.split(key, 5)

    features = jax.random.normal(k_feat, (B, S, H), dtype=jnp.float32)
    w_dense = jax.random.normal(k_wd, (H, H), dtype=jnp.float32) * 0.02
    b_dense = jax.random.normal(k_bd, (H,), dtype=jnp.float32) * 0.02
    w_out = jax.random.normal(k_wo, (L, H), dtype=jnp.float32) * 0.02
    b_out = jax.random.normal(k_bo, (L,), dtype=jnp.float32) * 0.02

    params = prepare_roberta_head_params(w_dense, b_dense, w_out, b_out)
    out = roberta_classification_head(features, params, num_labels=L)
    out = jax.block_until_ready(out)

    # Pure-JAX f32 reference (eval-mode semantics). Kernel uses bf16 MXU
    # inputs with f32 accumulation, so compare with a bf16-appropriate tol.
    x_cls = features[:, 0, :]
    ref = jnp.tanh(x_cls @ w_dense.T + b_dense) @ w_out.T + b_out
    assert out.shape == (B, L), out.shape
    assert jnp.allclose(out, ref, atol=2e-2, rtol=2e-2), (out, ref)

    print("KERNEL_OK")
</pallas_src>

<mosaic_0001>
module attributes {stable_mosaic.version = 11 : i64} {
  func.func @_head_kernel(%arg0: i32, %arg1: memref<2x128xf32, #tpu.memory_space<vmem>>, %arg2: memref<128x128xbf16, #tpu.memory_space<vmem>>, %arg3: memref<1x128xf32, #tpu.memory_space<vmem>>, %arg4: memref<128x128xbf16, #tpu.memory_space<vmem>>, %arg5: memref<1x128xf32, #tpu.memory_space<vmem>>, %arg6: memref<2x128xf32, #tpu.memory_space<vmem>>) attributes {dimension_semantics = [#tpu.dimension_semantics<parallel>], iteration_bounds = array<i64: 1>, scalar_prefetch = 0 : i64, scratch_operands = 0 : i64, tpu.core_type = #tpu.core_type<tc>, window_params = [{transform_indices = @transform_0, window_bounds = array<i64: 2, 128>}, {pipeline_mode = #tpu.pipeline_mode<synchronous>, transform_indices = @transform_1, window_bounds = array<i64: 128, 128>}, {pipeline_mode = #tpu.pipeline_mode<synchronous>, transform_indices = @transform_2, window_bounds = array<i64: 1, 128>}, {pipeline_mode = #tpu.pipeline_mode<synchronous>, transform_indices = @transform_3, window_bounds = array<i64: 128, 128>}, {pipeline_mode = #tpu.pipeline_mode<synchronous>, transform_indices = @transform_4, window_bounds = array<i64: 1, 128>}, {transform_indices = @transform_5, window_bounds = array<i64: 2, 128>}]} {
    %c0 = arith.constant 0 : index
    %c0_0 = arith.constant 0 : index
    %0 = vector.load %arg1[%c0, %c0_0] : memref<2x128xf32, #tpu.memory_space<vmem>>, vector<2x128xf32>
    %1 = arith.truncf %0 : vector<2x128xf32> to vector<2x128xbf16>
    %c0_1 = arith.constant 0 : index
    %c0_2 = arith.constant 0 : index
    %2 = vector.load %arg2[%c0_1, %c0_2] : memref<128x128xbf16, #tpu.memory_space<vmem>>, vector<128x128xbf16>
    %cst = arith.constant dense<0.000000e+00> : vector<2x128xf32>
    %3 = tpu.matmul %1, %2, %cst {dimension_numbers = #tpu.dot_dimension_numbers<[1], [0], [0], [1], [0, 0, 1, 1], [], []>} : vector<2x128xbf16>, vector<128x128xbf16>, vector<2x128xf32> -> vector<2x128xf32>
    %c0_3 = arith.constant 0 : index
    %c0_4 = arith.constant 0 : index
    %4 = vector.load %arg3[%c0_3, %c0_4] : memref<1x128xf32, #tpu.memory_space<vmem>>, vector<1x128xf32>
    %5 = vector.broadcast %4 : vector<1x128xf32> to vector<2x128xf32>
    %6 = arith.addf %3, %5 : vector<2x128xf32>
    %7 = math.tanh %6 : vector<2x128xf32>
    %8 = arith.truncf %7 : vector<2x128xf32> to vector<2x128xbf16>
    %c0_5 = arith.constant 0 : index
    %c0_6 = arith.constant 0 : index
    %9 = vector.load %arg4[%c0_5, %c0_6] : memref<128x128xbf16, #tpu.memory_space<vmem>>, vector<128x128xbf16>
    %cst_7 = arith.constant dense<0.000000e+00> : vector<2x128xf32>
    %10 = tpu.matmul %8, %9, %cst_7 {dimension_numbers = #tpu.dot_dimension_numbers<[1], [0], [0], [1], [0, 0, 1, 1], [], []>} : vector<2x128xbf16>, vector<128x128xbf16>, vector<2x128xf32> -> vector<2x128xf32>
    %c0_8 = arith.constant 0 : index
    %c0_9 = arith.constant 0 : index
    %11 = vector.load %arg5[%c0_8, %c0_9] : memref<1x128xf32, #tpu.memory_space<vmem>>, vector<1x128xf32>
    %12 = vector.broadcast %11 : vector<1x128xf32> to vector<2x128xf32>
    %13 = arith.addf %10, %12 : vector<2x128xf32>
    %c0_10 = arith.constant 0 : index
    %c0_11 = arith.constant 0 : index
    %14 = vector.load %arg6[%c0_10, %c0_11] : memref<2x128xf32, #tpu.memory_space<vmem>>, vector<2x128xf32>
    tpu.vector_store %arg6[%c0_10, %c0_11], %13 {strides = array<i32>} : memref<2x128xf32, #tpu.memory_space<vmem>>, vector<2x128xf32>,
    return
  }
  func.func @transform_0(%arg0: i32) -> (i32, i32) {
    %c0_i32 = arith.constant 0 : i32
    %c0_i32_0 = arith.constant 0 : i32
    return %arg0, %c0_i32 : i32, i32
  }
  func.func @transform_1(%arg0: i32) -> (i32, i32) {
    %c0_i32 = arith.constant 0 : i32
    %c0_i32_0 = arith.constant 0 : i32
    %c0_i32_1 = arith.constant 0 : i32
    return %c0_i32, %c0_i32_0 : i32, i32
  }
  func.func @transform_2(%arg0: i32) -> (i32, i32) {
    %c0_i32 = arith.constant 0 : i32
    %c0_i32_0 = arith.constant 0 : i32
    %c0_i32_1 = arith.constant 0 : i32
    return %c0_i32, %c0_i32_0 : i32, i32
  }
  func.func @transform_3(%arg0: i32) -> (i32, i32) {
    %c0_i32 = arith.constant 0 : i32
    %c0_i32_0 = arith.constant 0 : i32
    %c0_i32_1 = arith.constant 0 : i32
    return %c0_i32, %c0_i32_0 : i32, i32
  }
  func.func @transform_4(%arg0: i32) -> (i32, i32) {
    %c0_i32 = arith.constant 0 : i32
    %c0_i32_0 = arith.constant 0 : i32
    %c0_i32_1 = arith.constant 0 : i32
    return %c0_i32, %c0_i32_0 : i32, i32
  }
  func.func @transform_5(%arg0: i32) -> (i32, i32) {
    %c0_i32 = arith.constant 0 : i32
    %c0_i32_0 = arith.constant 0 : i32
    return %arg0, %c0_i32 : i32, i32
  }
}

</mosaic_0001>

<llo_original>
// kernel: roberta_classification_head.1
$region0: #{roberta_classification_head.1}
  #allocation0 [shape = 'u32[]', space=smem, size = 0x4, offset = 0x4, fixed_abs, tag = 'smem constant byte address 0x4 - core index']
  #allocation1 [shape = 'u32[72,128]{1,0:T(1,128)}', space=vmem, size = 0x9000, scoped, tag = 'internal scratch']
  %s0 = inlined_call_operand.vmem [shape: f32[2,1024], index: 0, kind: input, shape index: {}]
  %s1 = inlined_call_operand.hbm [shape: bf16[128,128], index: 1, kind: input, shape index: {}]
  %s2 = inlined_call_operand.vmem [shape: f32[1,128], index: 2, kind: input, shape index: {}]
  %s3 = inlined_call_operand.hbm [shape: bf16[128,128], index: 3, kind: input, shape index: {}]
  %s4 = inlined_call_operand.vmem [shape: f32[1,128], index: 4, kind: input, shape index: {}]
  %s5 = inlined_call_operand.hbm [shape: f32[2,128], index: 5, kind: output, shape index: {}]
  %s6 = sld [smem:[#allocation0]]
  $region38: #{roberta_classification_head.1} parent=0
    _
  %s8 = ssub.s32 1, %s6
  %s9 = scalar_select 0, %s8, %s6
  $region1: #{roberta_classification_head.1} parent=0
    #allocation2 [shape = 'u8[32768]{0}', space=vmem, size = 0x8000, scoped, tag = 'input window, operand 1, single buffered']
    #allocation3 [shape = 's32[1]{0}', space=sflag, size = 0x4, scoped, tag = 'scoped memory for roberta_classification_head.1']
    #allocation4 [shape = 's32[1]{0}', space=sflag, size = 0x4, scoped, tag = 'scoped memory for roberta_classification_head.1']
    #allocation5 [shape = 'u8[32768]{0}', space=vmem, size = 0x8000, scoped, tag = 'input window, operand 3, single buffered']
    #allocation6 [shape = 's32[1]{0}', space=sflag, size = 0x4, scoped, tag = 'scoped memory for roberta_classification_head.1']
    #allocation7 [shape = 'u8[1024]{0}', space=vmem, size = 0x400, scoped, tag = 'output window, operand 0, single buffered']
    %10 = vsyncpa [#allocation3], 0
    %11 = vsyncpa [#allocation6], 0
    %12 = vsyncpa [#allocation4], 0
    // Predicated region
    $region2: #{roberta_classification_head.1} parent=1 // pred_check
      _
    $region3: #{roberta_classification_head.1} parent=1 // pred_check_branch
      %14 = sbr.rel (0) target = $region5
    $region4: #{roberta_classification_head.1} parent=1 // pred_region
      _
    $region5: #{roberta_classification_head.1} parent=1 // pred_fallthru
      _
    // Predicated region
    $region6: #{roberta_classification_head.1} parent=1 // pred_check
      _
    $region7: #{roberta_classification_head.1} parent=1 // pred_check_branch
      %16 = sbr.rel (0) target = $region9
    $region8: #{roberta_classification_head.1} parent=1 // pred_region
      %18 = vsyncadd [#allocation3], 0
      %s19 = sshll.u32 %s1, 4
      %s20 = int_to_ptr.hbm [resolvable:$true] %s19
      %s21 = sshll.u32 [#allocation2], 4
      %s22 = int_to_ptr.vmem [resolvable:$true] %s21
      %27 = dma.hbm_to_vmem [thread:$0]  %s20, 1024, %s22, [#allocation3], 64, 64, 4
    $region9: #{roberta_classification_head.1} parent=1 // pred_fallthru
      _
    // Predicated region
    $region10: #{roberta_classification_head.1} parent=1 // pred_check
      _
    $region11: #{roberta_classification_head.1} parent=1 // pred_check_branch
      %29 = sbr.rel (0) target = $region13
    $region12: #{roberta_classification_head.1} parent=1 // pred_region
      _
    $region13: #{roberta_classification_head.1} parent=1 // pred_fallthru
      _
    // Predicated region
    $region14: #{roberta_classification_head.1} parent=1 // pred_check
      _
    $region15: #{roberta_classification_head.1} parent=1 // pred_check_branch
      %31 = sbr.rel (0) target = $region17
    $region16: #{roberta_classification_head.1} parent=1 // pred_region
      %33 = vsyncadd [#allocation6], 0
      %s34 = sshll.u32 %s3, 4
      %s35 = int_to_ptr.hbm [resolvable:$true] %s34
      %s36 = sshll.u32 [#allocation5], 4
      %s37 = int_to_ptr.vmem [resolvable:$true] %s36
      %42 = dma.hbm_to_vmem [thread:$0]  %s35, 1024, %s37, [#allocation6], 64, 64, 4
    $region17: #{roberta_classification_head.1} parent=1 // pred_fallthru
      _
    // Predicated region
    $region18: #{roberta_classification_head.1} parent=1 // pred_check
      _
    $region19: #{roberta_classification_head.1} parent=1 // pred_check_branch
      %44 = sbr.rel (0) target = $region21
    $region20: #{roberta_classification_head.1} parent=1 // pred_region
      _
    $region21: #{roberta_classification_head.1} parent=1 // pred_fallthru
      _
    // Predicated region
    $region22: #{roberta_classification_head.1} parent=1 // pred_check
      _
    $region23: #{roberta_classification_head.1} parent=1 // pred_check_branch
      %46 = sbr.rel (0) target = $region25
    $region24: #{roberta_classification_head.1} parent=1 // pred_region
      %48 = dma.done [#allocation3], 1024
    $region25: #{roberta_classification_head.1} parent=1 // pred_fallthru
      _
    // Predicated region
    $region26: #{roberta_classification_head.1} parent=1 // pred_check
      _
    $region27: #{roberta_classification_head.1} parent=1 // pred_check_branch
      %50 = sbr.rel (0) target = $region29
    $region28: #{roberta_classification_head.1} parent=1 // pred_region
      %52 = dma.done [#allocation6], 1024
    $region29: #{roberta_classification_head.1} parent=1 // pred_fallthru
      _
    %v53 = vld [vmem:[%s0] sm:$0x3]
    %v54 = vpack.c.bf16 %v53, %v53
    %v55 = vld [vmem:[#allocation2] sm:$0xf]
    %v56 = vld [vmem:[#allocation2 + $0x4] sm:$0xf]
    %v57 = vld [vmem:[#allocation2 + $0x8] sm:$0xf]
    %v58 = vld [vmem:[#allocation2 + $0xc] sm:$0xf]
    %v59 = vld [vmem:[#allocation2 + $0x10] sm:$0xf]
    %v60 = vld [vmem:[#allocation2 + $0x14] sm:$0xf]
    %v61 = vld [vmem:[#allocation2 + $0x18] sm:$0xf]
    %v62 = vld [vmem:[#allocation2 + $0x1c] sm:$0xf]
    %v63 = vld [vmem:[#allocation2 + $0x20] sm:$0xf]
    %v64 = vld [vmem:[#allocation2 + $0x24] sm:$0xf]
    %v65 = vld [vmem:[#allocation2 + $0x28] sm:$0xf]
    %v66 = vld [vmem:[#allocation2 + $0x2c] sm:$0xf]
    %v67 = vld [vmem:[#allocation2 + $0x30] sm:$0xf]
    %v68 = vld [vmem:[#allocation2 + $0x34] sm:$0xf]
    %v69 = vld [vmem:[#allocation2 + $0x38] sm:$0xf]
    %v70 = vld [vmem:[#allocation2 + $0x3c] sm:$0xf]
    %v71 = vld [vmem:[%s2] sm:$0x1]
    %v73 = vperm.slane %v71, 0
    %v91 = vunpack.c.l.b16 %v55
    %v92 = vunpack.c.l.b16 %v56
    %v93 = vunpack.c.l.b16 %v57
    %v94 = vunpack.c.l.b16 %v58
    %v95 = vunpack.c.l.b16 %v59
    %v96 = vunpack.c.l.b16 %v60
    %v97 = vunpack.c.l.b16 %v61
    %v98 = vunpack.c.l.b16 %v62
    %v99 = vunpack.c.l.b16 %v63
    %v100 = vunpack.c.l.b16 %v64
    %v101 = vunpack.c.l.b16 %v65
    %v102 = vunpack.c.l.b16 %v66
    %v103 = vunpack.c.l.b16 %v67
    %v104 = vunpack.c.l.b16 %v68
    %v105 = vunpack.c.l.b16 %v69
    %v106 = vunpack.c.l.b16 %v70
    %v107 = vpack.c.b16 %v92, %v91
    %v108 = vpack.c.b16 %v94, %v93
    %v109 = vpack.c.b16 %v96, %v95
    %v110 = vpack.c.b16 %v98, %v97
    %v111 = vpack.c.b16 %v100, %v99
    %v112 = vpack.c.b16 %v102, %v101
    %v113 = vpack.c.b16 %v104, %v103
    %v114 = vpack.c.b16 %v106, %v105
    %123 = vmatpush.bf16.msra.mxu0 %v114
    %124 = vmatpush.bf16.msra.mxu0 %v113
    %125 = vmatpush.bf16.msra.mxu0 %v112
    %126 = vmatpush.bf16.msra.mxu0 %v111
    %127 = vmatpush.bf16.msra.mxu0 %v110
    %128 = vmatpush.bf16.msra.mxu0 %v109
    %129 = vmatpush.bf16.msra.mxu0 %v108
    %130 = vmatpush.bf16.msra.mxu0 %v107
    %131 = vmatmul.bf16.gmra.mxu0 %v54
    %v132 = vpop.f32.mrf.mxu0
    %v133 = vadd.f32 %v73, %v132
    %v134 = vpop.f32.mrf.mxu0
    %135 = vdwg.mxu0
    %v136 = vtanh.pop %v133
    %v137 = vpack.c.bf16 %v136, %v136
    %v138 = vld [vmem:[#allocation5] sm:$0xf]
    %v139 = vld [vmem:[#allocation5 + $0x4] sm:$0xf]
    %v140 = vld [vmem:[#allocation5 + $0x8] sm:$0xf]
    %v141 = vld [vmem:[#allocation5 + $0xc] sm:$0xf]
    %v142 = vld [vmem:[#allocation5 + $0x10] sm:$0xf]
    %v143 = vld [vmem:[#allocation5 + $0x14] sm:$0xf]
    %v144 = vld [vmem:[#allocation5 + $0x18] sm:$0xf]
    %v145 = vld [vmem:[#allocation5 + $0x1c] sm:$0xf]
    %v146 = vld [vmem:[#allocation5 + $0x20] sm:$0xf]
    %v147 = vld [vmem:[#allocation5 + $0x24] sm:$0xf]
    %v148 = vld [vmem:[#allocation5 + $0x28] sm:$0xf]
    %v149 = vld [vmem:[#allocation5 + $0x2c] sm:$0xf]
    %v150 = vld [vmem:[#allocation5 + $0x30] sm:$0xf]
    %v151 = vld [vmem:[#allocation5 + $0x34] sm:$0xf]
    %v152 = vld [vmem:[#allocation5 + $0x38] sm:$0xf]
    %v153 = vld [vmem:[#allocation5 + $0x3c] sm:$0xf]
    %v154 = vld [vmem:[%s4] sm:$0x1]
    %v156 = vperm.slane %v154, 0
    %v174 = vunpack.c.l.b16 %v138
    %v175 = vunpack.c.l.b16 %v139
    %v176 = vunpack.c.l.b16 %v140
    %v177 = vunpack.c.l.b16 %v141
    %v178 = vunpack.c.l.b16 %v142
    %v179 = vunpack.c.l.b16 %v143
    %v180 = vunpack.c.l.b16 %v144
    %v181 = vunpack.c.l.b16 %v145
    %v182 = vunpack.c.l.b16 %v146
    %v183 = vunpack.c.l.b16 %v147
    %v184 = vunpack.c.l.b16 %v148
    %v185 = vunpack.c.l.b16 %v149
    %v186 = vunpack.c.l.b16 %v150
    %v187 = vunpack.c.l.b16 %v151
    %v188 = vunpack.c.l.b16 %v152
    %v189 = vunpack.c.l.b16 %v153
    %v190 = vpack.c.b16 %v175, %v174
    %v191 = vpack.c.b16 %v177, %v176
    %v192 = vpack.c.b16 %v179, %v178
    %v193 = vpack.c.b16 %v181, %v180
    %v194 = vpack.c.b16 %v183, %v182
    %v195 = vpack.c.b16 %v185, %v184
    %v196 = vpack.c.b16 %v187, %v186
    %v197 = vpack.c.b16 %v189, %v188
    %206 = vmatpush.bf16.msra.mxu0 %v197
    %207 = vmatpush.bf16.msra.mxu0 %v196
    %208 = vmatpush.bf16.msra.mxu0 %v195
    %209 = vmatpush.bf16.msra.mxu0 %v194
    %210 = vmatpush.bf16.msra.mxu0 %v193
    %211 = vmatpush.bf16.msra.mxu0 %v192
    %212 = vmatpush.bf16.msra.mxu0 %v191
    %213 = vmatpush.bf16.msra.mxu0 %v190
    %214 = vmatmul.bf16.gmra.mxu0 %v137
    %v215 = vpop.f32.mrf.mxu0
    %v216 = vadd.f32 %v156, %v215
    %v217 = vpop.f32.mrf.mxu0
    %218 = vdwg.mxu0
    %219 = vst [vmem:[#allocation7] sm:$0x3] %v216
    // Predicated region
    $region30: #{roberta_classification_head.1} parent=1 // pred_check
      _
    $region31: #{roberta_classification_head.1} parent=1 // pred_check_branch
      %221 = sbr.rel (0) target = $region33
    $region32: #{roberta_classification_head.1} parent=1 // pred_region
      %223 = vsyncadd [#allocation4], 0
      %s225 = sshll.u32 [#allocation7], 4
      %s226 = int_to_ptr.vmem [resolvable:$true] %s225
      %s227 = sshll.u32 %s5, 4
      %s228 = int_to_ptr.hbm [resolvable:$true] %s227
      %230 = dma.vmem_to_hbm [thread:$0]  %s226, 32, %s228, [#allocation4]
    $region33: #{roberta_classification_head.1} parent=1 // pred_fallthru
      _
    // Predicated region
    $region34: #{roberta_classification_head.1} parent=1 // pred_check
      _
    $region35: #{roberta_classification_head.1} parent=1 // pred_check_branch
      %232 = sbr.rel (0) target = $region37
    $region36: #{roberta_classification_head.1} parent=1 // pred_region
      %234 = dma.done [#allocation4], 32
    $region37: #{roberta_classification_head.1} parent=1 // pred_fallthru
      _
    %235 = vsyncpa [#allocation3], 1
    %236 = vsyncpa [#allocation6], 1
    %237 = vsyncpa [#allocation4], 1

</llo_original>
